<compile_context>
chip_gen: v6e
topology: v6e:2x2x1
jax: 0.10.0
libtpu: 0.0.40
codegen_flags: <defaults>
</compile_context>

<pallas_src>
import jax
import jax.numpy as jnp
from jax.experimental import pallas as pl
from jax.experimental.pallas import tpu as pltpu


def _pos_enc_kernel(x_ref, pos_ref, o_ref):
    # x_ref: (TB, TF) tile; pos_ref: (1, TF) broadcast over rows; o_ref: (TB, TF)
    o_ref[...] = x_ref[...] + pos_ref[...]


# Conservative defaults, valid on v7x (64 MiB physical / 32 MiB scoped default).
_DEFAULT_TILE_BUDGET = 24 * 1024 * 1024
_DEFAULT_VMEM_LIMIT = 32 * 1024 * 1024
# Force >=2 batch blocks above this size so v7x's two TensorCores both stream.
_MIN_PARALLEL_BYTES = 1 * 1024 * 1024


def _vmem_budgets():
    """(tile_budget_bytes, vmem_limit_bytes); larger on v5e/v6e (128 MiB VMEM)."""
    tile_budget = _DEFAULT_TILE_BUDGET
    vmem_limit = _DEFAULT_VMEM_LIMIT
    try:
        cap = getattr(pltpu.get_tpu_info(), "vmem_capacity_bytes", None)
        if cap is not None and cap >= 96 * 1024 * 1024:
            tile_budget = 48 * 1024 * 1024
            vmem_limit = 64 * 1024 * 1024
    except Exception:
        pass  # interpret mode / unknown chip: keep the v7x-safe numbers
    return tile_budget, vmem_limit


def _largest_divisor_tile(total, limit, quantum):
    """Largest multiple of `quantum` <= limit that divides `total`.

    Falls back to the largest multiple of `quantum` <= limit (the final block
    is then partial / masked, which is still correct)."""
    limit = max(quantum, (limit // quantum) * quantum)
    for cand in range(limit, quantum - 1, -quantum):
        if total % cand == 0:
            return cand
    return limit


def _choose_tiles(B, F, itemsize, budget):
    """Pick (tb, tf) so 2x(x tile) + 2x(out tile) + pos tile fit `budget`."""
    # ~5 live tile-sized buffers: double-buffered x, double-buffered out, pos.
    per_buf = max(budget // 5, 8 * 128 * itemsize)

    # Lane-axis (F) tile: full row when 8 rows fit one buffer, else split F in
    # 128-aligned chunks (divisor of F preferred; partial last block otherwise).
    if 8 * F * itemsize <= per_buf:
        tf = F
    else:
        max_tf = max(128, (per_buf // (8 * itemsize)) // 128 * 128)
        if F % 128 == 0:
            tf = _largest_divisor_tile(F, max_tf, 128)
        else:
            tf = max_tf  # last F block partial (masked) but lane-aligned tiles

    # Batch tile under the per-buffer budget for the chosen tf.
    max_tb = max(8, per_buf // (tf * itemsize))
    if B <= max_tb:
        tb = B
    else:
        tb = _largest_divisor_tile(B, max_tb, 8)

    # v7x has 2 TensorCores: if a non-trivial problem collapsed to one block,
    # split the batch so both cores (marked "parallel") get work.
    total_bytes = B * F * itemsize
    if (pl.cdiv(B, tb) * pl.cdiv(F, tf) == 1 and B >= 16
            and total_bytes > _MIN_PARALLEL_BYTES):
        tb = max(8, (B // 2) // 8 * 8)

    return tb, tf


def positional_encoding(x, position_embeddings, *, donate_x=False,
                        tile_budget_bytes=None):
    """x: (B, N, D), position_embeddings: (1, N, D) -> (B, N, D)."""
    B, N, D = x.shape
    assert position_embeddings.shape == (1, N, D)

    F = N * D
    x2 = x.reshape(B, F)                      # lane-dense last dim
    pos2 = position_embeddings.reshape(1, F)

    tile_budget, vmem_limit = _vmem_budgets()
    if tile_budget_bytes is not None:
        tile_budget = tile_budget_bytes

    itemsize = x.dtype.itemsize
    tb, tf = _choose_tiles(B, F, itemsize, tile_budget)
    grid_b = pl.cdiv(B, tb)
    grid_f = pl.cdiv(F, tf)

    call_kwargs = {}
    if donate_x:
        # Enable at real call sites where x is dead afterwards (in-place add).
        call_kwargs["input_output_aliases"] = {0: 0}

    if grid_b * grid_f == 1:
        # Tiny problem: single VMEM-resident block, no per-step pipeline cost.
        out2 = pl.pallas_call(
            _pos_enc_kernel,
            out_shape=jax.ShapeDtypeStruct((B, F), x.dtype),
            in_specs=[
                pl.BlockSpec(memory_space=pltpu.MemorySpace.VMEM),
                pl.BlockSpec(memory_space=pltpu.MemorySpace.VMEM),
            ],
            out_specs=pl.BlockSpec(memory_space=pltpu.MemorySpace.VMEM),
            compiler_params=pltpu.CompilerParams(vmem_limit_bytes=vmem_limit),
            **call_kwargs,
        )(x2, pos2)
    else:
        out2 = pl.pallas_call(
            _pos_enc_kernel,
            out_shape=jax.ShapeDtypeStruct((B, F), x.dtype),
            grid_spec=pltpu.PrefetchScalarGridSpec(
                num_scalar_prefetch=0,
                grid=(grid_b, grid_f),
                in_specs=[
                    # (tb, tf) batch x lane tile of x.
                    pl.BlockSpec((tb, tf), lambda b, f: (b, f)),
                    # pos: constant over batch blocks, tracks the F block.
                    pl.BlockSpec((1, tf), lambda b, f: (0, f)),
                ],
                out_specs=pl.BlockSpec((tb, tf), lambda b, f: (b, f)),
            ),
            compiler_params=pltpu.CompilerParams(
                # Both axes independent: v7x's 2 TensorCores split the blocks;
                # no-op on v5e/v6e (1 TC).
                dimension_semantics=("parallel", "parallel"),
                vmem_limit_bytes=vmem_limit,
            ),
            **call_kwargs,
        )(x2, pos2)

    return out2.reshape(B, N, D)


if __name__ == "__main__":
    # Module config: num_patches=7, dim=32 -> N = num_patches + 1 = 8
    num_patches = 7
    dim = 32
    batch = 2
    N = num_patches + 1

    key = jax.random.PRNGKey(0)
    kx, kp = jax.random.split(key)

    # Deterministic "parameter" init (mirrors torch.randn(1, num_patches+1, dim))
    position_embeddings = jax.random.normal(kp, (1, N, dim), dtype=jnp.float32)
    x = jax.random.normal(kx, (batch, N, dim), dtype=jnp.float32)

    out = positional_encoding(x, position_embeddings)
    out = jax.block_until_ready(out)

    ref = x + position_embeddings
    assert out.shape == (batch, N, dim)
    assert out.dtype == x.dtype
    assert jnp.allclose(out, ref, atol=1e-6), "mismatch vs reference (gridless)"

    # Also exercise the tiled 2-D grid path (tiny forced budget -> small tiles).
    kx2, kp2 = jax.random.split(jax.random.PRNGKey(1))
    B2, N2, D2 = 32, 8, 128
    pos_big = jax.random.normal(kp2, (1, N2, D2), dtype=jnp.float32)
    x_big = jax.random.normal(kx2, (B2, N2, D2), dtype=jnp.float32)
    out_big = positional_encoding(x_big, pos_big, tile_budget_bytes=64 * 1024)
    out_big = jax.block_until_ready(out_big)
    assert jnp.allclose(out_big, x_big + pos_big, atol=1e-6), \
        "mismatch vs reference (grid path)"

    print("KERNEL_OK")
</pallas_src>

<mosaic_0001>
module attributes {stable_mosaic.version = 11 : i64} {
  func.func @_pos_enc_kernel(%arg0: memref<2x256xf32, #tpu.memory_space<vmem>>, %arg1: memref<1x256xf32, #tpu.memory_space<vmem>>, %arg2: memref<2x256xf32, #tpu.memory_space<vmem>>) attributes {dimension_semantics = [], scalar_prefetch = 0 : i64, scratch_operands = 0 : i64, tpu.core_type = #tpu.core_type<tc>} {
    %c0 = arith.constant 0 : index
    %c0_0 = arith.constant 0 : index
    %0 = vector.load %arg0[%c0, %c0_0] : memref<2x256xf32, #tpu.memory_space<vmem>>, vector<2x256xf32>
    %c0_1 = arith.constant 0 : index
    %c0_2 = arith.constant 0 : index
    %1 = vector.load %arg1[%c0_1, %c0_2] : memref<1x256xf32, #tpu.memory_space<vmem>>, vector<1x256xf32>
    %2 = vector.broadcast %1 : vector<1x256xf32> to vector<2x256xf32>
    %3 = arith.addf %0, %2 : vector<2x256xf32>
    %c0_3 = arith.constant 0 : index
    %c0_4 = arith.constant 0 : index
    %4 = vector.load %arg2[%c0_3, %c0_4] : memref<2x256xf32, #tpu.memory_space<vmem>>, vector<2x256xf32>
    tpu.vector_store %arg2[%c0_3, %c0_4], %3 {strides = array<i32>} : memref<2x256xf32, #tpu.memory_space<vmem>>, vector<2x256xf32>,
    return
  }
}

</mosaic_0001>

<llo_original>
// kernel: tpu_custom_call.1
$region0: #{tpu_custom_call.1}
  #allocation0 [shape = 'u32[]', space=smem, size = 0x4, offset = 0x4, fixed_abs, tag = 'smem constant byte address 0x4 - core index']
  #allocation1 [shape = 'u32[144,128]{1,0:T(1,128)}', space=vmem, size = 0x12000, scoped, tag = 'internal scratch']
  %s0 = inlined_call_operand.hbm [shape: f32[2,256], index: 0, kind: input, shape index: {}]
  %s1 = inlined_call_operand.hbm [shape: f32[1,256], index: 1, kind: input, shape index: {}]
  %s2 = inlined_call_operand.hbm [shape: f32[2,256], index: 2, kind: output, shape index: {}]
  %s3 = sld [smem:[#allocation0]]
  $region26: #{tpu_custom_call.1} parent=0
    _
  %s5 = ssub.s32 1, %s3
  %s6 = scalar_select 0, %s5, %s3
  $region1: #{tpu_custom_call.1} parent=0
    #allocation2 [shape = 'u8[2048]{0}', space=vmem, size = 0x800, scoped, tag = 'input window, operand 0, single buffered']
    #allocation3 [shape = 's32[1]{0}', space=sflag, size = 0x4, scoped, tag = 'scoped memory for tpu_custom_call.1']
    #allocation4 [shape = 's32[1]{0}', space=sflag, size = 0x4, scoped, tag = 'scoped memory for tpu_custom_call.1']
    #allocation5 [shape = 'u8[1024]{0}', space=vmem, size = 0x400, scoped, tag = 'input window, operand 1, single buffered']
    #allocation6 [shape = 's32[1]{0}', space=sflag, size = 0x4, scoped, tag = 'scoped memory for tpu_custom_call.1']
    #allocation7 [shape = 'u8[2048]{0}', space=vmem, size = 0x800, scoped, tag = 'output window, operand 0, single buffered']
    %7 = vsyncpa [#allocation3], 0
    %8 = vsyncpa [#allocation6], 0
    %9 = vsyncpa [#allocation4], 0
    // Predicated region
    $region2: #{tpu_custom_call.1} parent=1 // pred_check
      _
    $region3: #{tpu_custom_call.1} parent=1 // pred_check_branch
      %11 = sbr.rel (0) target = $region5
    $region4: #{tpu_custom_call.1} parent=1 // pred_region
      %s13 = ssub.s32 64, 64
      %14 = vsyncadd [#allocation3], %s13
      %s16 = sshll.u32 [#allocation2], 4
      %s17 = int_to_ptr.vmem [resolvable:$true] %s16
      %19 = dma.hbm_to_vmem [thread:$0]  %s0, 64, %s17, [#allocation3]
    $region5: #{tpu_custom_call.1} parent=1 // pred_fallthru
      _
    // Predicated region
    $region6: #{tpu_custom_call.1} parent=1 // pred_check
      _
    $region7: #{tpu_custom_call.1} parent=1 // pred_check_branch
      %21 = sbr.rel (0) target = $region9
    $region8: #{tpu_custom_call.1} parent=1 // pred_region
      %s23 = ssub.s32 32, 32
      %24 = vsyncadd [#allocation6], %s23
      %s26 = sshll.u32 [#allocation5], 4
      %s27 = int_to_ptr.vmem [resolvable:$true] %s26
      %29 = dma.hbm_to_vmem [thread:$0]  %s1, 32, %s27, [#allocation6]
    $region9: #{tpu_custom_call.1} parent=1 // pred_fallthru
      _
    // Predicated region
    $region10: #{tpu_custom_call.1} parent=1 // pred_check
      _
    $region11: #{tpu_custom_call.1} parent=1 // pred_check_branch
      %31 = sbr.rel (0) target = $region13
    $region12: #{tpu_custom_call.1} parent=1 // pred_region
      %32 = dma.done [#allocation3], 64
    $region13: #{tpu_custom_call.1} parent=1 // pred_fallthru
      _
    // Predicated region
    $region14: #{tpu_custom_call.1} parent=1 // pred_check
      _
    $region15: #{tpu_custom_call.1} parent=1 // pred_check_branch
      %34 = sbr.rel (0) target = $region17
    $region16: #{tpu_custom_call.1} parent=1 // pred_region
      %35 = dma.done [#allocation6], 32
    $region17: #{tpu_custom_call.1} parent=1 // pred_fallthru
      _
    %v36 = vld [vmem:[#allocation2] sm:$0xf]
    %v37 = vld [vmem:[#allocation5] sm:$0x3]
    %v39 = vlaneseq
    %v40 = vshrl.u32 %v39, 7
    %v41 = vsub.s32 0, %v40
    %v42 = vrot.slane %v37, %v41
    %v43 = vlaneseq
    %v44 = vshrl.u32 %v43, 7
    %v45 = vsub.s32 1, %v44
    %v46 = vrot.slane %v37, %v45
    %v47 = vcombine.low %v42, %v46
    %v49 = vunpack.c.l.s4 1983009808
    %v50 = vunpack.c.0.s8 %v49
    %v51 = vlaneseq
    %v52 = vshrl.u32 %v51, 7
    %v53 = vsub.s32 %v50, %v52
    %v54 = vrot.slane %v47, %v53
    %v56 = vadd.f32 %v36, %v54
    %57 = vst [vmem:[#allocation7] sm:$0xf] %v56
    // Predicated region
    $region18: #{tpu_custom_call.1} parent=1 // pred_check
      _
    $region19: #{tpu_custom_call.1} parent=1 // pred_check_branch
      %59 = sbr.rel (0) target = $region21
    $region20: #{tpu_custom_call.1} parent=1 // pred_region
      %s61 = ssub.s32 64, 64
      %62 = vsyncadd [#allocation4], %s61
      %s64 = sshll.u32 [#allocation7], 4
      %s65 = int_to_ptr.vmem [resolvable:$true] %s64
      %67 = dma.vmem_to_hbm [thread:$0]  %s65, 64, %s2, [#allocation4]
    $region21: #{tpu_custom_call.1} parent=1 // pred_fallthru
      _
    // Predicated region
    $region22: #{tpu_custom_call.1} parent=1 // pred_check
      _
    $region23: #{tpu_custom_call.1} parent=1 // pred_check_branch
      %69 = sbr.rel (0) target = $region25
    $region24: #{tpu_custom_call.1} parent=1 // pred_region
      %70 = dma.done [#allocation4], 64
    $region25: #{tpu_custom_call.1} parent=1 // pred_fallthru
      _
    %71 = vsyncpa [#allocation3], 1
    %72 = vsyncpa [#allocation6], 1
    %73 = vsyncpa [#allocation4], 1

</llo_original>
